<compile_context>
chip_gen: v7x
topology: tpu7x:2x2x1
jax: 0.10.0
libtpu: 0.0.40
codegen_flags: <defaults>
</compile_context>

<pallas_src>
import math

import jax
import jax.numpy as jnp
from jax import lax
from jax.experimental import pallas as pl
from jax.experimental.pallas import tpu as pltpu


def _round_up(x, m):
    return (x + m - 1) // m * m


def adv_net_kernel(x_ref, w1_ref, b1_ref, w2_ref, b2_ref, w3_ref, b3_ref, o_ref):
    # Layer 1: Linear -> ReLU (dropout = identity in eval).
    # bf16 operands on the MXU, f32 accumulation; bias/ReLU in f32 on the VPU.
    x = x_ref[...].astype(jnp.bfloat16)
    h1 = jnp.dot(x, w1_ref[...], preferred_element_type=jnp.float32)
    h1 = jnp.maximum(h1 + b1_ref[...], 0.0)

    # Layer 2: Linear -> ReLU (dropout = identity in eval).
    h2 = jnp.dot(h1.astype(jnp.bfloat16), w2_ref[...],
                 preferred_element_type=jnp.float32)
    h2 = jnp.maximum(h2 + b2_ref[...], 0.0)

    # Layer 3: N=1 linear on the MXU, contracting the LAST dim of both
    # operands so the result comes out lane-dense: (8, TB).  Only row 0 of
    # w3_ref is real (rows 1..7 are zero padding for sublane alignment).
    y = lax.dot_general(w3_ref[...], h2.astype(jnp.bfloat16),
                        dimension_numbers=(((1,), (1,)), ((), ())),
                        preferred_element_type=jnp.float32)
    y = y[0:1, :] + b3_ref[0]                           # (1, TB), f32

    # Numerically stable sigmoid: exp(-|y|) <= 1, never overflows.
    e = jnp.exp(-jnp.abs(y))
    inv = 1.0 / (1.0 + e)
    o_ref[0] = jnp.where(y >= 0.0, inv, e * inv)        # lane-dense (1, TB) store


def _vmem_capacity_bytes():
    try:
        return int(pltpu.get_tpu_info().vmem_capacity_bytes)
    except Exception:
        return 64 << 20  # conservative: v7x per-TensorCore VMEM


def _plan(B, F, H):
    """Pick batch tile TB, grid length and scoped-VMEM limit for this chip."""
    cap = _vmem_capacity_bytes()
    # Tile-independent resident VMEM: bf16 W1/W2/w3-rows + f32 bias rows.
    resident = 2 * (F * H + H * H + 8 * H) + 2 * 8 * max(H, 128) * 4
    # Per-batch-row VMEM: f32 x tile (double-buffered) + bf16 cast,
    # f32 h1/h2 (+ bf16 casts), double-buffered lane-dense out row.
    per_row = 2 * 4 * F + 2 * F + 2 * (4 + 2) * H + 2 * 4
    headroom = 4 << 20
    tb_max = int((0.6 * cap - resident - headroom) // per_row)
    tb_max = max(8, min(tb_max, 2048))
    tb_max -= tb_max % 8
    if B <= tb_max:
        if B >= 512:
            # Split into >= 2 tiles so the "parallel" axis can span both
            # v7x TensorCores.
            tb = _round_up((B + 1) // 2, 8)
        else:
            tb = B  # single full-extent tile (block == array dim is legal)
    else:
        tb = tb_max
    n_tiles = -(-B // tb)
    vmem_bytes = resident + per_row * tb + headroom
    vmem_limit = int(min(max(vmem_bytes, 16 << 20), int(0.9 * cap)))
    return tb, n_tiles, vmem_limit


def prepare_params(params):
    """One-time parameter prep (hoisted out of the per-call forward):
    bf16 matmul weights, f32 bias rows, w3 as an (8, H) bf16 slab
    (row 0 = w3, rows 1..7 zero) for the lane-dense layer-3 matmul,
    and b3 as an f32 scalar destined for SMEM."""
    w1, b1, w2, b2, w3, b3 = params
    H = w1.shape[1]
    w3_rows = jnp.zeros((8, H), jnp.bfloat16).at[0, :].set(
        w3.reshape(H).astype(jnp.bfloat16))
    return (w1.astype(jnp.bfloat16),
            b1.reshape(1, H).astype(jnp.float32),
            w2.astype(jnp.bfloat16),
            b2.reshape(1, H).astype(jnp.float32),
            w3_rows,
            b3.reshape(1).astype(jnp.float32))


def adversarial_network_forward(x, prepared_params):
    """x: [B, in_feature] float32 -> [B, 1] float32."""
    w1, b1, w2, b2, w3r, b3 = prepared_params
    B, F = x.shape
    H = w1.shape[1]

    TB, n_tiles, vmem_limit = _plan(B, F, H)

    # x streams straight from HBM (no wrapper pad/cast pass); the feature dim
    # uses the full array extent so F needs no 128-padding.
    if n_tiles >= 4:
        x_spec = pl.BlockSpec((TB, F), lambda i: (i, 0),
                              pipeline_mode=pl.Buffered(3))
    else:
        x_spec = pl.BlockSpec((TB, F), lambda i: (i, 0))

    out = pl.pallas_call(
        adv_net_kernel,
        out_shape=jax.ShapeDtypeStruct((n_tiles, 1, TB), jnp.float32),
        grid_spec=pltpu.PrefetchScalarGridSpec(
            num_scalar_prefetch=0,
            grid=(n_tiles,),
            in_specs=[
                x_spec,                                             # x : streamed
                pl.BlockSpec((F, H), lambda i: (0, 0)),             # W1: resident
                pl.BlockSpec((1, H), lambda i: (0, 0)),             # b1: resident
                pl.BlockSpec((H, H), lambda i: (0, 0)),             # W2: resident
                pl.BlockSpec((1, H), lambda i: (0, 0)),             # b2: resident
                pl.BlockSpec((8, H), lambda i: (0, 0)),             # w3 rows: resident
                pl.BlockSpec(memory_space=pltpu.MemorySpace.SMEM),  # b3 scalar
            ],
            out_specs=pl.BlockSpec((1, 1, TB), lambda i: (i, 0, 0)),
        ),
        compiler_params=pltpu.CompilerParams(
            dimension_semantics=("parallel",),
            vmem_limit_bytes=vmem_limit,
        ),
    )(x, w1, b1, w2, b2, w3r, b3)

    # Lane-dense (n_tiles, 1, TB) -> (B, 1); any partial-tile tail is dropped.
    return out.reshape(n_tiles * TB)[:B].reshape(B, 1)


def init_params(key, in_feature, hidden_size):
    """Xavier-normal weights / zero biases (matches init_weights for nn.Linear:
    nn.init.xavier_normal_(weight), zeros_(bias)).  Stored as [fan_in, fan_out]
    so the forward computes x @ W (== PyTorch x @ W.T)."""
    k1, k2, k3 = jax.random.split(key, 3)

    def xavier_normal(k, fan_in, fan_out):
        std = math.sqrt(2.0 / (fan_in + fan_out))
        return std * jax.random.normal(k, (fan_in, fan_out), dtype=jnp.float32)

    w1 = xavier_normal(k1, in_feature, hidden_size)
    b1 = jnp.zeros((1, hidden_size), dtype=jnp.float32)
    w2 = xavier_normal(k2, hidden_size, hidden_size)
    b2 = jnp.zeros((1, hidden_size), dtype=jnp.float32)
    w3 = xavier_normal(k3, hidden_size, 1)
    b3 = jnp.zeros((1,), dtype=jnp.float32)
    return (w1, b1, w2, b2, w3, b3)


if __name__ == "__main__":
    in_feature = 32
    hidden_size = 32
    batch = 8

    key = jax.random.PRNGKey(0)
    kx, kp = jax.random.split(key)
    x = jax.random.normal(kx, (batch, in_feature), dtype=jnp.float32)
    params = init_params(kp, in_feature, hidden_size)
    prepared = prepare_params(params)   # one-time param prep (not per-call)

    y = adversarial_network_forward(x, prepared)
    y = jax.block_until_ready(y)

    # pure-JAX f32 reference (kernel uses bf16 matmul operands -> loose tol)
    w1, b1, w2, b2, w3, b3 = params
    h1 = jnp.maximum(x @ w1 + b1, 0.0)
    h2 = jnp.maximum(h1 @ w2 + b2, 0.0)
    ref = jax.nn.sigmoid(h2 @ w3 + b3)
    assert y.shape == (batch, 1)
    assert jnp.allclose(y, ref, atol=3e-2, rtol=3e-2), float(
        jnp.max(jnp.abs(y - ref)))

    print("KERNEL_OK")
</pallas_src>

<mosaic_0001>
module attributes {stable_mosaic.version = 11 : i64} {
  func.func @adv_net_kernel(%arg0: i32, %arg1: memref<8x32xf32, #tpu.memory_space<vmem>>, %arg2: memref<32x32xbf16, #tpu.memory_space<vmem>>, %arg3: memref<1x32xf32, #tpu.memory_space<vmem>>, %arg4: memref<32x32xbf16, #tpu.memory_space<vmem>>, %arg5: memref<1x32xf32, #tpu.memory_space<vmem>>, %arg6: memref<8x32xbf16, #tpu.memory_space<vmem>>, %arg7: memref<1xf32, #tpu.memory_space<smem>>, %arg8: memref<1x1x8xf32, #tpu.memory_space<vmem>>) attributes {dimension_semantics = [#tpu.dimension_semantics<parallel>], iteration_bounds = array<i64: 1>, scalar_prefetch = 0 : i64, scratch_operands = 0 : i64, tpu.core_type = #tpu.core_type<tc>, window_params = [{transform_indices = @transform_0, window_bounds = array<i64: 8, 32>}, {pipeline_mode = #tpu.pipeline_mode<synchronous>, transform_indices = @transform_1, window_bounds = array<i64: 32, 32>}, {pipeline_mode = #tpu.pipeline_mode<synchronous>, transform_indices = @transform_2, window_bounds = array<i64: 1, 32>}, {pipeline_mode = #tpu.pipeline_mode<synchronous>, transform_indices = @transform_3, window_bounds = array<i64: 32, 32>}, {pipeline_mode = #tpu.pipeline_mode<synchronous>, transform_indices = @transform_4, window_bounds = array<i64: 1, 32>}, {pipeline_mode = #tpu.pipeline_mode<synchronous>, transform_indices = @transform_5, window_bounds = array<i64: 8, 32>}, {transform_indices = @transform_6, window_bounds = array<i64: 1>}, {transform_indices = @transform_7, window_bounds = array<i64: 1, 1, 8>}]} {
    %c0 = arith.constant 0 : index
    %c0_0 = arith.constant 0 : index
    %0 = vector.load %arg1[%c0, %c0_0] : memref<8x32xf32, #tpu.memory_space<vmem>>, vector<8x32xf32>
    %1 = arith.truncf %0 : vector<8x32xf32> to vector<8x32xbf16>
    %c0_1 = arith.constant 0 : index
    %c0_2 = arith.constant 0 : index
    %2 = vector.load %arg2[%c0_1, %c0_2] : memref<32x32xbf16, #tpu.memory_space<vmem>>, vector<32x32xbf16>
    %cst = arith.constant dense<0.000000e+00> : vector<8x32xf32>
    %3 = tpu.matmul %1, %2, %cst {dimension_numbers = #tpu.dot_dimension_numbers<[1], [0], [0], [1], [0, 0, 1, 1], [], []>} : vector<8x32xbf16>, vector<32x32xbf16>, vector<8x32xf32> -> vector<8x32xf32>
    %c0_3 = arith.constant 0 : index
    %c0_4 = arith.constant 0 : index
    %4 = vector.load %arg3[%c0_3, %c0_4] : memref<1x32xf32, #tpu.memory_space<vmem>>, vector<1x32xf32>
    %5 = vector.broadcast %4 : vector<1x32xf32> to vector<8x32xf32>
    %6 = arith.addf %3, %5 : vector<8x32xf32>
    %cst_5 = arith.constant 0.000000e+00 : f32
    %7 = vector.broadcast %cst_5 : f32 to vector<8x32xf32>
    %8 = arith.maximumf %6, %7 : vector<8x32xf32>
    %9 = arith.truncf %8 : vector<8x32xf32> to vector<8x32xbf16>
    %c0_6 = arith.constant 0 : index
    %c0_7 = arith.constant 0 : index
    %10 = vector.load %arg4[%c0_6, %c0_7] : memref<32x32xbf16, #tpu.memory_space<vmem>>, vector<32x32xbf16>
    %cst_8 = arith.constant dense<0.000000e+00> : vector<8x32xf32>
    %11 = tpu.matmul %9, %10, %cst_8 {dimension_numbers = #tpu.dot_dimension_numbers<[1], [0], [0], [1], [0, 0, 1, 1], [], []>} : vector<8x32xbf16>, vector<32x32xbf16>, vector<8x32xf32> -> vector<8x32xf32>
    %c0_9 = arith.constant 0 : index
    %c0_10 = arith.constant 0 : index
    %12 = vector.load %arg5[%c0_9, %c0_10] : memref<1x32xf32, #tpu.memory_space<vmem>>, vector<1x32xf32>
    %13 = vector.broadcast %12 : vector<1x32xf32> to vector<8x32xf32>
    %14 = arith.addf %11, %13 : vector<8x32xf32>
    %cst_11 = arith.constant 0.000000e+00 : f32
    %15 = vector.broadcast %cst_11 : f32 to vector<8x32xf32>
    %16 = arith.maximumf %14, %15 : vector<8x32xf32>
    %c0_12 = arith.constant 0 : index
    %c0_13 = arith.constant 0 : index
    %17 = vector.load %arg6[%c0_12, %c0_13] : memref<8x32xbf16, #tpu.memory_space<vmem>>, vector<8x32xbf16>
    %18 = arith.truncf %16 : vector<8x32xf32> to vector<8x32xbf16>
    %cst_14 = arith.constant dense<0.000000e+00> : vector<8x8xf32>
    %19 = tpu.matmul %17, %18, %cst_14 {dimension_numbers = #tpu.dot_dimension_numbers<[1], [1], [0], [0], [0, 0, 1, 0], [], []>} : vector<8x32xbf16>, vector<8x32xbf16>, vector<8x8xf32> -> vector<8x8xf32>
    %20 = vector.extract_strided_slice %19 {offsets = [0, 0], sizes = [1, 8], strides = [1, 1]} : vector<8x8xf32> to vector<1x8xf32>
    %c0_15 = arith.constant 0 : index
    %21 = memref.load %arg7[%c0_15] : memref<1xf32, #tpu.memory_space<smem>>
    %22 = vector.broadcast %21 : f32 to vector<1x8xf32>
    %23 = arith.addf %20, %22 : vector<1x8xf32>
    %24 = math.absf %23 : vector<1x8xf32>
    %cst_16 = arith.constant 0.000000e+00 : f32
    %25 = vector.broadcast %cst_16 : f32 to vector<1x8xf32>
    %26 = arith.subf %25, %24 : vector<1x8xf32>
    %27 = math.exp %26 : vector<1x8xf32>
    %cst_17 = arith.constant 1.000000e+00 : f32
    %28 = vector.broadcast %cst_17 : f32 to vector<1x8xf32>
    %29 = arith.addf %28, %27 : vector<1x8xf32>
    %cst_18 = arith.constant 1.000000e+00 : f32
    %30 = vector.broadcast %cst_18 : f32 to vector<1x8xf32>
    %31 = arith.divf %30, %29 : vector<1x8xf32>
    %cst_19 = arith.constant 0.000000e+00 : f32
    %32 = vector.broadcast %cst_19 : f32 to vector<1x8xf32>
    %33 = arith.cmpf oge, %23, %32 : vector<1x8xf32>
    %34 = arith.mulf %27, %31 : vector<1x8xf32>
    %35 = arith.select %33, %31, %34 : vector<1x8xi1>, vector<1x8xf32>
    %c0_20 = arith.constant 0 : index
    %c0_21 = arith.constant 0 : index
    %c0_22 = arith.constant 0 : index
    %36 = vector.load %arg8[%c0_20, %c0_21, %c0_22] : memref<1x1x8xf32, #tpu.memory_space<vmem>>, vector<1x1x8xf32>
    %37 = vector.shape_cast %36 : vector<1x1x8xf32> to vector<1x8xf32>
    %38 = vector.shape_cast %35 : vector<1x8xf32> to vector<1x1x8xf32>
    tpu.vector_store %arg8[%c0_20, %c0_21, %c0_22], %38 {strides = array<i32>} : memref<1x1x8xf32, #tpu.memory_space<vmem>>, vector<1x1x8xf32>,
    return
  }
  func.func @transform_0(%arg0: i32) -> (i32, i32) {
    %c0_i32 = arith.constant 0 : i32
    %c0_i32_0 = arith.constant 0 : i32
    return %arg0, %c0_i32 : i32, i32
  }
  func.func @transform_1(%arg0: i32) -> (i32, i32) {
    %c0_i32 = arith.constant 0 : i32
    %c0_i32_0 = arith.constant 0 : i32
    %c0_i32_1 = arith.constant 0 : i32
    return %c0_i32, %c0_i32_0 : i32, i32
  }
  func.func @transform_2(%arg0: i32) -> (i32, i32) {
    %c0_i32 = arith.constant 0 : i32
    %c0_i32_0 = arith.constant 0 : i32
    %c0_i32_1 = arith.constant 0 : i32
    return %c0_i32, %c0_i32_0 : i32, i32
  }
  func.func @transform_3(%arg0: i32) -> (i32, i32) {
    %c0_i32 = arith.constant 0 : i32
    %c0_i32_0 = arith.constant 0 : i32
    %c0_i32_1 = arith.constant 0 : i32
    return %c0_i32, %c0_i32_0 : i32, i32
  }
  func.func @transform_4(%arg0: i32) -> (i32, i32) {
    %c0_i32 = arith.constant 0 : i32
    %c0_i32_0 = arith.constant 0 : i32
    %c0_i32_1 = arith.constant 0 : i32
    return %c0_i32, %c0_i32_0 : i32, i32
  }
  func.func @transform_5(%arg0: i32) -> (i32, i32) {
    %c0_i32 = arith.constant 0 : i32
    %c0_i32_0 = arith.constant 0 : i32
    %c0_i32_1 = arith.constant 0 : i32
    return %c0_i32, %c0_i32_0 : i32, i32
  }
  func.func @transform_6(%arg0: i32) -> i32 {
    %c0_i32 = arith.constant 0 : i32
    %c0_i32_0 = arith.constant 0 : i32
    return %c0_i32 : i32
  }
  func.func @transform_7(%arg0: i32) -> (i32, i32, i32) {
    %c0_i32 = arith.constant 0 : i32
    %c0_i32_0 = arith.constant 0 : i32
    %c0_i32_1 = arith.constant 0 : i32
    return %arg0, %c0_i32, %c0_i32_0 : i32, i32, i32
  }
}

</mosaic_0001>

<llo_original>
// kernel: tpu_custom_call.1
$region0: #{tpu_custom_call.1}
  #allocation0 [shape = 'u32[]', space=smem, size = 0x4, offset = 0x4, fixed_abs, tag = 'smem constant byte address 0x4 - core index']
  #allocation1 [shape = 'u32[144,128]{1,0:T(1,128)}', space=vmem, size = 0x12000, scoped, tag = 'internal scratch']
  #allocation2 [shape = 'f32[1]{0:T(128)S(6)}', space=smem, size = 0x200, scoped, tag = 'scoped memory for tpu_custom_call.1']
  %s0 = inlined_call_operand.hbm [shape: f32[8,32], index: 0, kind: input, shape index: {}]
  %s1 = inlined_call_operand.hbm [shape: bf16[32,32], index: 1, kind: input, shape index: {}]
  %s2 = inlined_call_operand.vmem [shape: f32[1,32], index: 2, kind: input, shape index: {}]
  %s3 = inlined_call_operand.hbm [shape: bf16[32,32], index: 3, kind: input, shape index: {}]
  %s4 = inlined_call_operand.vmem [shape: f32[1,32], index: 4, kind: input, shape index: {}]
  %s5 = inlined_call_operand.vmem [shape: bf16[8,32], index: 5, kind: input, shape index: {}]
  %s6 = inlined_call_operand.<no memory space> [shape: f32[1], index: 6, kind: input, shape index: {}]
  %s7 = inlined_call_operand.hbm [shape: f32[1,1,8], index: 7, kind: output, shape index: {}]
  %s8 = sld [smem:[#allocation0]]
  $region50: #{tpu_custom_call.1} parent=0
    _
  %s10 = ssub.s32 1, %s8
  %s11 = scalar_select 0, %s10, %s8
  %12 = sst [smem:[#allocation2]] %s6
  $region1: #{tpu_custom_call.1} parent=0
    #allocation3 [shape = 'u8[4096]{0}', space=vmem, size = 0x1000, scoped, tag = 'input window, operand 0, single buffered']
    #allocation4 [shape = 's32[1]{0}', space=sflag, size = 0x4, scoped, tag = 'scoped memory for tpu_custom_call.1']
    #allocation5 [shape = 's32[1]{0}', space=sflag, size = 0x4, scoped, tag = 'scoped memory for tpu_custom_call.1']
    #allocation6 [shape = 'u8[8192]{0}', space=vmem, size = 0x2000, scoped, tag = 'input window, operand 1, single buffered']
    #allocation7 [shape = 's32[1]{0}', space=sflag, size = 0x4, scoped, tag = 'scoped memory for tpu_custom_call.1']
    #allocation8 [shape = 'u8[8192]{0}', space=vmem, size = 0x2000, scoped, tag = 'input window, operand 3, single buffered']
    #allocation9 [shape = 'u8[512]{0}', space=vmem, size = 0x400, scoped, tag = 'output window, operand 0, single buffered']
    %13 = vsyncpa [#allocation4], 0
    %14 = vsyncpa [#allocation7], 0
    %15 = vsyncpa [#allocation5], 0
    // Predicated region
    $region2: #{tpu_custom_call.1} parent=1 // pred_check
      _
    $region3: #{tpu_custom_call.1} parent=1 // pred_check_branch
      %17 = sbr.rel (0) target = $region5
    $region4: #{tpu_custom_call.1} parent=1 // pred_region
      %s19 = ssub.s32 128, 128
      %20 = vsyncadd [#allocation4], %s19
      %s22 = sshll.u32 [#allocation3], 4
      %s23 = int_to_ptr.vmem [resolvable:$true] %s22
      %25 = dma.hbm_to_vmem [thread:$0]  %s0, 128, %s23, [#allocation4]
    $region5: #{tpu_custom_call.1} parent=1 // pred_fallthru
      _
    // Predicated region
    $region6: #{tpu_custom_call.1} parent=1 // pred_check
      _
    $region7: #{tpu_custom_call.1} parent=1 // pred_check_branch
      %27 = sbr.rel (0) target = $region9
    $region8: #{tpu_custom_call.1} parent=1 // pred_region
      %s29 = ssub.s32 256, 256
      %30 = vsyncadd [#allocation7], %s29
      %s31 = sshll.u32 [#allocation6], 4
      %s32 = int_to_ptr.vmem [resolvable:$true] %s31
      %37 = dma.hbm_to_vmem [thread:$0]  %s1, 256, %s32, [#allocation7], 64, 64, 4
    $region9: #{tpu_custom_call.1} parent=1 // pred_fallthru
      _
    // Predicated region
    $region10: #{tpu_custom_call.1} parent=1 // pred_check
      _
    $region11: #{tpu_custom_call.1} parent=1 // pred_check_branch
      %39 = sbr.rel (0) target = $region13
    $region12: #{tpu_custom_call.1} parent=1 // pred_region
      _
    $region13: #{tpu_custom_call.1} parent=1 // pred_fallthru
      _
    // Predicated region
    $region14: #{tpu_custom_call.1} parent=1 // pred_check
      _
    $region15: #{tpu_custom_call.1} parent=1 // pred_check_branch
      %41 = sbr.rel (0) target = $region17
    $region16: #{tpu_custom_call.1} parent=1 // pred_region
      %s43 = ssub.s32 256, 256
      %44 = vsyncadd [#allocation7], %s43
      %s45 = sshll.u32 [#allocation8], 4
      %s46 = int_to_ptr.vmem [resolvable:$true] %s45
      %51 = dma.hbm_to_vmem [thread:$0]  %s3, 256, %s46, [#allocation7], 64, 64, 4
    $region17: #{tpu_custom_call.1} parent=1 // pred_fallthru
      _
    // Predicated region
    $region18: #{tpu_custom_call.1} parent=1 // pred_check
      _
    $region19: #{tpu_custom_call.1} parent=1 // pred_check_branch
      %53 = sbr.rel (0) target = $region21
    $region20: #{tpu_custom_call.1} parent=1 // pred_region
      _
    $region21: #{tpu_custom_call.1} parent=1 // pred_fallthru
      _
    // Predicated region
    $region22: #{tpu_custom_call.1} parent=1 // pred_check
      _
    $region23: #{tpu_custom_call.1} parent=1 // pred_check_branch
      %55 = sbr.rel (0) target = $region25
    $region24: #{tpu_custom_call.1} parent=1 // pred_region
      _
    $region25: #{tpu_custom_call.1} parent=1 // pred_fallthru
      _
    // Predicated region
    $region26: #{tpu_custom_call.1} parent=1 // pred_check
      _
    $region27: #{tpu_custom_call.1} parent=1 // pred_check_branch
      %57 = sbr.rel (0) target = $region29
    $region28: #{tpu_custom_call.1} parent=1 // pred_region
      _
    $region29: #{tpu_custom_call.1} parent=1 // pred_fallthru
      _
    // Predicated region
    $region30: #{tpu_custom_call.1} parent=1 // pred_check
      _
    $region31: #{tpu_custom_call.1} parent=1 // pred_check_branch
      %59 = sbr.rel (0) target = $region33
    $region32: #{tpu_custom_call.1} parent=1 // pred_region
      %60 = dma.done [#allocation4], 128
    $region33: #{tpu_custom_call.1} parent=1 // pred_fallthru
      _
    // Predicated region
    $region34: #{tpu_custom_call.1} parent=1 // pred_check
      _
    $region35: #{tpu_custom_call.1} parent=1 // pred_check_branch
      %62 = sbr.rel (0) target = $region37
    $region36: #{tpu_custom_call.1} parent=1 // pred_region
      %63 = dma.done [#allocation7], 256
    $region37: #{tpu_custom_call.1} parent=1 // pred_fallthru
      _
    // Predicated region
    $region38: #{tpu_custom_call.1} parent=1 // pred_check
      _
    $region39: #{tpu_custom_call.1} parent=1 // pred_check_branch
      %65 = sbr.rel (0) target = $region41
    $region40: #{tpu_custom_call.1} parent=1 // pred_region
      %66 = dma.done [#allocation7], 256
    $region41: #{tpu_custom_call.1} parent=1 // pred_fallthru
      _
    %v68 = vld [vmem:[#allocation3] sm:$0xff]
    %v69 = vpack.c.bf16 %v68, %v68
    %v70 = vld [vmem:[#allocation6] sm:$0xf]
    %v71 = vld [vmem:[#allocation6 + $0x4] sm:$0xf]
    %v72 = vld [vmem:[#allocation6 + $0x8] sm:$0xf]
    %v73 = vld [vmem:[#allocation6 + $0xc] sm:$0xf]
    %v74 = vld [vmem:[%s2] sm:$0x1]
    %v76 = vlaneseq
    %v77 = vshrl.u32 %v76, 7
    %v78 = vsub.s32 0, %v77
    %v79 = vrot.slane %v74, %v78
    %v85 = vunpack.c.l.b16 %v70
    %v86 = vunpack.c.l.b16 %v71
    %v87 = vunpack.c.l.b16 %v72
    %v88 = vunpack.c.l.b16 %v73
    %v89 = vpack.c.b16 %v86, %v85
    %v90 = vpack.c.b16 %v88, %v87
    %vm93 = vcmask 261120
    %v95 = vsel %vm93, %v69, 0
    %97 = vmatprep.subr.bf16.mxu0 0
    %98 = vmatpush1.bf16.msra.mxu0 %v89
    %99 = vmatprep.subr.bf16.mxu0 0
    %100 = vmatpush1.bf16.msra.mxu0 %v90
    %101 = vmatprep.subr.bf16.mxu0 0
    %102 = vmatpush1.bf16.msra.mxu0 0
    %103 = vmatprep.subr.bf16.mxu0 0
    %104 = vmatpush1.bf16.msra.mxu0 0
    %105 = vmatprep.subr.bf16.mxu0 0
    %106 = vmatpush1.bf16.msra.mxu0 0
    %107 = vmatprep.subr.bf16.mxu0 0
    %108 = vmatpush1.bf16.msra.mxu0 0
    %109 = vmatprep.subr.bf16.mxu0 0
    %110 = vmatpush1.bf16.msra.mxu0 0
    %111 = vmatprep.subr.bf16.mxu0 0
    %112 = vmatpush1.bf16.msra.mxu0 0
    %113 = vmatprep.subr.bf16.mxu0 0
    %114 = vmatpush1.bf16.msra.mxu0 0
    %115 = vmatprep.subr.bf16.mxu0 0
    %116 = vmatpush1.bf16.msra.mxu0 0
    %117 = vmatprep.subr.bf16.mxu0 0
    %118 = vmatpush1.bf16.msra.mxu0 0
    %119 = vmatprep.subr.bf16.mxu0 0
    %120 = vmatpush1.bf16.msra.mxu0 0
    %121 = vmatprep.subr.bf16.mxu0 0
    %122 = vmatpush1.bf16.msra.mxu0 0
    %123 = vmatprep.subr.bf16.mxu0 0
    %124 = vmatpush1.bf16.msra.mxu0 0
    %125 = vmatprep.subr.bf16.mxu0 0
    %126 = vmatpush1.bf16.msra.mxu0 0
    %127 = vmatprep.subr.bf16.mxu0 0
    %128 = vmatpush1.bf16.msra.mxu0 0
    %129 = vmatprep.mubr.bf16.mxu0 0
    %130 = vmatmul.mubr.bf16.gmra.mrb[0].mxu0 %v95
    %v131 = vpop.f32.mrb[0].mxu0
    %v132 = vadd.f32 %v79, %v131
    %v133 = vpop.f32.mrb[0].mxu0
    %v134 = vpop.f32.mrb[0].mxu0
    %v135 = vpop.f32.mrb[0].mxu0
    %136 = vdwg.mxu0
    %v137 = vmax.f32 %v132, 0.0
    %v138 = vpack.c.bf16 %v137, %v137
    %v139 = vld [vmem:[#allocation8] sm:$0xf]
    %v140 = vld [vmem:[#allocation8 + $0x4] sm:$0xf]
    %v141 = vld [vmem:[#allocation8 + $0x8] sm:$0xf]
    %v142 = vld [vmem:[#allocation8 + $0xc] sm:$0xf]
    %v143 = vld [vmem:[%s4] sm:$0x1]
    %v145 = vlaneseq
    %v146 = vshrl.u32 %v145, 7
    %v147 = vsub.s32 0, %v146
    %v148 = vrot.slane %v143, %v147
    %v154 = vunpack.c.l.b16 %v139
    %v155 = vunpack.c.l.b16 %v140
    %v156 = vunpack.c.l.b16 %v141
    %v157 = vunpack.c.l.b16 %v142
    %v158 = vpack.c.b16 %v155, %v154
    %v159 = vpack.c.b16 %v157, %v156
    %v163 = vsel %vm93, %v138, 0
    %165 = vmatprep.subr.bf16.mxu0 0
    %166 = vmatpush1.bf16.msra.mxu0 %v158
    %167 = vmatprep.subr.bf16.mxu0 0
    %168 = vmatpush1.bf16.msra.mxu0 %v159
    %169 = vmatprep.subr.bf16.mxu0 0
    %170 = vmatpush1.bf16.msra.mxu0 0
    %171 = vmatprep.subr.bf16.mxu0 0
    %172 = vmatpush1.bf16.msra.mxu0 0
    %173 = vmatprep.subr.bf16.mxu0 0
    %174 = vmatpush1.bf16.msra.mxu0 0
    %175 = vmatprep.subr.bf16.mxu0 0
    %176 = vmatpush1.bf16.msra.mxu0 0
    %177 = vmatprep.subr.bf16.mxu0 0
    %178 = vmatpush1.bf16.msra.mxu0 0
    %179 = vmatprep.subr.bf16.mxu0 0
    %180 = vmatpush1.bf16.msra.mxu0 0
    %181 = vmatprep.subr.bf16.mxu0 0
    %182 = vmatpush1.bf16.msra.mxu0 0
    %183 = vmatprep.subr.bf16.mxu0 0
    %184 = vmatpush1.bf16.msra.mxu0 0
    %185 = vmatprep.subr.bf16.mxu0 0
    %186 = vmatpush1.bf16.msra.mxu0 0
    %187 = vmatprep.subr.bf16.mxu0 0
    %188 = vmatpush1.bf16.msra.mxu0 0
    %189 = vmatprep.subr.bf16.mxu0 0
    %190 = vmatpush1.bf16.msra.mxu0 0
    %191 = vmatprep.subr.bf16.mxu0 0
    %192 = vmatpush1.bf16.msra.mxu0 0
    %193 = vmatprep.subr.bf16.mxu0 0
    %194 = vmatpush1.bf16.msra.mxu0 0
    %195 = vmatprep.subr.bf16.mxu0 0
    %196 = vmatpush1.bf16.msra.mxu0 0
    %197 = vmatprep.mubr.bf16.mxu0 0
    %198 = vmatmul.mubr.bf16.gmra.mrb[0].mxu0 %v163
    %v199 = vpop.f32.mrb[0].mxu0
    %v200 = vadd.f32 %v148, %v199
    %v201 = vpop.f32.mrb[0].mxu0
    %v202 = vpop.f32.mrb[0].mxu0
    %v203 = vpop.f32.mrb[0].mxu0
    %204 = vdwg.mxu0
    %v205 = vmax.f32 %v200, 0.0
    %v206 = vld [vmem:[%s5] sm:$0xf]
    %v207 = vpack.c.bf16 %v205, %v205
    %v209 = vsel %vm93, %v206, 0
    %v212 = vsel %vm93, %v207, 0
    %214 = vmatprep.subr.bf16.mxu0 0
    %215 = vmatpush1.bf16.xpose.msra.mxu0 %v212
    %216 = vmatprep.subr.bf16.mxu0 0
    %217 = vmatpush1.bf16.xpose.msra.mxu0 0
    %218 = vmatprep.subr.bf16.mxu0 0
    %219 = vmatpush1.bf16.xpose.msra.mxu0 0
    %220 = vmatprep.subr.bf16.mxu0 0
    %221 = vmatpush1.bf16.xpose.msra.mxu0 0
    %222 = vmatprep.subr.bf16.mxu0 0
    %223 = vmatpush1.bf16.xpose.msra.mxu0 0
    %224 = vmatprep.subr.bf16.mxu0 0
    %225 = vmatpush1.bf16.xpose.msra.mxu0 0
    %226 = vmatprep.subr.bf16.mxu0 0
    %227 = vmatpush1.bf16.xpose.msra.mxu0 0
    %228 = vmatprep.subr.bf16.mxu0 0
    %229 = vmatpush1.bf16.xpose.msra.mxu0 0
    %230 = vmatprep.subr.bf16.mxu0 0
    %231 = vmatpush1.bf16.xpose.msra.mxu0 0
    %232 = vmatprep.subr.bf16.mxu0 0
    %233 = vmatpush1.bf16.xpose.msra.mxu0 0
    %234 = vmatprep.subr.bf16.mxu0 0
    %235 = vmatpush1.bf16.xpose.msra.mxu0 0
    %236 = vmatprep.subr.bf16.mxu0 0
    %237 = vmatpush1.bf16.xpose.msra.mxu0 0
    %238 = vmatprep.subr.bf16.mxu0 0
    %239 = vmatpush1.bf16.xpose.msra.mxu0 0
    %240 = vmatprep.subr.bf16.mxu0 0
    %241 = vmatpush1.bf16.xpose.msra.mxu0 0
    %242 = vmatprep.subr.bf16.mxu0 0
    %243 = vmatpush1.bf16.xpose.msra.mxu0 0
    %244 = vmatprep.subr.bf16.mxu0 0
    %245 = vmatpush1.bf16.xpose.msra.mxu0 0
    %246 = vmatprep.mubr.bf16.mxu0 0
    %247 = vmatmul.mubr.bf16.gmra.mrb[0].mxu0 %v209
    %v248 = vpop.f32.mrb[0].mxu0
    %v249 = vadd.f32 0.0, %v248
    %v250 = vpop.f32.mrb[0].mxu0
    %v251 = vpop.f32.mrb[0].mxu0
    %v252 = vpop.f32.mrb[0].mxu0
    %253 = vdwg.mxu0
    %s254 = sld [smem:[#allocation2]]
    %v255 = vstv %s254
    %v256 = vadd.f32 %v249, %v255
    %v257 = vand.u32 2147483647, %v256
    %v258 = vsub.f32 0.0, %v257
    %v259 = vmul.f32 %v258, 1.442695
    %v260 = vpow.pop %v259
    %v261 = vadd.f32 %v260, 1.0
    %v262 = vrcp.pop %v261
    %v263 = vmul.f32 1.0, %v262
    %vm264 = vcmp.ge.f32.partialorder %v256, 0.0
    %v265 = vmul.f32 %v260, %v263
    %v266 = vsel %vm264, %v263, %v265
    %vm267 = vcmask 57344
    %268 = vst.msk [vmem:[#allocation9] sm:$0x1] %vm267, %v266
    // Predicated region
    $region42: #{tpu_custom_call.1} parent=1 // pred_check
      _
    $region43: #{tpu_custom_call.1} parent=1 // pred_check_branch
      %270 = sbr.rel (0) target = $region45
    $region44: #{tpu_custom_call.1} parent=1 // pred_region
      %s272 = ssub.s32 16, 16
      %273 = vsyncadd [#allocation5], %s272
      %s275 = sshll.u32 [#allocation9], 4
      %s276 = int_to_ptr.vmem [resolvable:$true] %s275
      %278 = dma.vmem_to_hbm [thread:$0]  %s276, 16, %s7, [#allocation5]
    $region45: #{tpu_custom_call.1} parent=1 // pred_fallthru
      _
    // Predicated region
    $region46: #{tpu_custom_call.1} parent=1 // pred_check
      _
    $region47: #{tpu_custom_call.1} parent=1 // pred_check_branch
      %280 = sbr.rel (0) target = $region49
    $region48: #{tpu_custom_call.1} parent=1 // pred_region
      %281 = dma.done [#allocation5], 16
    $region49: #{tpu_custom_call.1} parent=1 // pred_fallthru
      _
    %282 = vsyncpa [#allocation4], 1
    %283 = vsyncpa [#allocation7], 1
    %284 = vsyncpa [#allocation5], 1

</llo_original>
